<compile_context>
chip_gen: v5e
topology: v5e:2x2
jax: 0.10.0
libtpu: 0.0.40
codegen_flags: <defaults>
</compile_context>

<pallas_src>
import jax
import jax.numpy as jnp
from jax import lax
from jax.experimental import pallas as pl
from jax.experimental.pallas import tpu as pltpu


# Set to jnp.bfloat16 for ~2x MXU throughput on the two batched matmuls
# (the __main__ tolerance adapts); the serial recurrence always runs in f32
# so the carried hidden state stays numerically faithful to the f32 module.
COMPUTE_DTYPE = jnp.float32


# ---------------------------------------------------------------------------
# Kernels
# ---------------------------------------------------------------------------
def matmul_bias_kernel(x_ref, w_ref, b_ref, o_ref):
    """o = x @ w + b for one (TM, K) row tile; f32 MXU accumulation."""
    o_ref[...] = (jnp.dot(x_ref[...], w_ref[...],
                          preferred_element_type=jnp.float32)
                  + b_ref[...]).astype(o_ref.dtype)


def rnn_recurrence_kernel(xp_ref, whh_ref, h_all_ref, h_ref):
    """Serial tanh recurrence over one (T_BLK, B_BLK, Hp) block.

    xp_ref   : (T_BLK, B_BLK, Hp) pre-projected inputs (x @ W_ih^T + b), f32
    whh_ref  : (Hp, Hp)           hidden->hidden weight (pre-transposed), f32
    h_all_ref: (T_BLK, B_BLK, Hp) hidden state for every timestep (output)
    h_ref    : (B_BLK, Hp)        VMEM scratch carrying h across time blocks
    """
    # First time block of each batch block starts from h = 0.
    @pl.when(pl.program_id(1) == 0)
    def _():
        h_ref[...] = jnp.zeros_like(h_ref)

    whh = whh_ref[...]            # loop-invariant: load once, not per step
    t_blk = xp_ref.shape[0]

    def step(i, h):
        h_new = jnp.tanh(xp_ref[i]
                         + jnp.dot(h, whh, preferred_element_type=jnp.float32))
        h_all_ref[i] = h_new
        return h_new

    # Small static trip count -> fully unroll so the LLO scheduler can overlap
    # the MXU push, the EUP tanh and the next step's loads.
    h_ref[...] = lax.fori_loop(0, t_blk, step, h_ref[...], unroll=True)


# ---------------------------------------------------------------------------
# Pallas wrappers
# ---------------------------------------------------------------------------
def _round_up(x, m):
    return ((x + m - 1) // m) * m


def _row_tile(m):
    for cand in (512, 256, 128, 64, 32, 16, 8):
        if m % cand == 0:
            return cand
    return m


def _matmul_bias(x, w, b):
    """Tiled (M, K) @ (K, N) + (1, N) -> (M, N) f32, grid over M row tiles."""
    M, K = x.shape
    N = w.shape[1]
    tm = _row_tile(M)
    return pl.pallas_call(
        matmul_bias_kernel,
        out_shape=jax.ShapeDtypeStruct((M, N), jnp.float32),
        grid_spec=pltpu.PrefetchScalarGridSpec(
            num_scalar_prefetch=0,
            grid=(M // tm,),
            in_specs=[pl.BlockSpec((tm, K), lambda i: (i, 0)),
                      pl.BlockSpec((K, N), lambda i: (0, 0)),
                      pl.BlockSpec((1, N), lambda i: (0, 0))],
            out_specs=pl.BlockSpec((tm, N), lambda i: (i, 0))),
        compiler_params=pltpu.CompilerParams(
            dimension_semantics=("parallel",)),
        cost_estimate=pl.CostEstimate(
            flops=2 * M * K * N,
            transcendentals=0,
            bytes_accessed=(M * K + K * N + N) * x.dtype.itemsize + M * N * 4),
    )(x, w, b)


def _recurrence(xp_tm, whh_p):
    """Serial tanh recurrence; returns all hidden states (T, Bp, Hp) f32."""
    T, Bp, Hp = xp_tm.shape
    t_blk = 8
    while T % t_blk:
        t_blk //= 2
    b_blk = 8                                   # Bp is padded to a multiple of 8
    grid = (Bp // b_blk, T // t_blk)
    return pl.pallas_call(
        rnn_recurrence_kernel,
        out_shape=jax.ShapeDtypeStruct((T, Bp, Hp), jnp.float32),
        grid_spec=pltpu.PrefetchScalarGridSpec(
            num_scalar_prefetch=0,
            grid=grid,
            in_specs=[pl.BlockSpec((t_blk, b_blk, Hp), lambda b, t: (t, b, 0)),
                      pl.BlockSpec((Hp, Hp), lambda b, t: (0, 0))],
            out_specs=pl.BlockSpec((t_blk, b_blk, Hp), lambda b, t: (t, b, 0)),
            scratch_shapes=[pltpu.VMEM((b_blk, Hp), jnp.float32)]),
        compiler_params=pltpu.CompilerParams(
            # batch blocks are independent -> megacore-parallel on v7x;
            # time blocks carry the hidden state -> serial ("arbitrary").
            dimension_semantics=("parallel", "arbitrary")),
        cost_estimate=pl.CostEstimate(
            flops=2 * T * Bp * Hp * Hp,
            transcendentals=T * Bp * Hp,
            bytes_accessed=2 * T * Bp * Hp * 4 + Hp * Hp * 4),
    )(xp_tm, whh_p)


def rnn_forward(x_idx, params, compute_dtype=COMPUTE_DTYPE):
    """Full forward: Embedding (glue) -> input proj -> recurrence -> FC."""
    emb_w, w_ih, w_hh, b_ih, b_hh, w_fc, b_fc = (
        params["emb_w"], params["w_ih"], params["w_hh"],
        params["b_ih"], params["b_hh"], params["w_fc"], params["b_fc"])

    B, T = x_idx.shape
    E = emb_w.shape[1]
    H = w_ih.shape[0]
    V = w_fc.shape[0]

    # Padded sizes: lane dims -> multiple of 128, batch -> multiple of 8.
    Bp = _round_up(B, 8)
    Ep = _round_up(E, 128)
    Hp = _round_up(H, 128)
    Vp = _round_up(V, 128)

    # Embedding lookup (gather) -- plain-JAX glue.
    x_emb = jnp.take(emb_w, x_idx, axis=0)                       # (B, T, E)

    # Zero-pad once.  Padded lanes/rows stay exactly zero through the whole
    # pipeline (zero weights rows/cols, zero bias, tanh(0)=0), so no masking
    # is needed and results are unaffected.
    x_p = jnp.zeros((Bp, T, Ep), jnp.float32).at[:B, :, :E].set(x_emb)

    # Padded, pre-transposed weights (row-major act @ W layout).
    wih_p = (jnp.zeros((Ep, Hp), jnp.float32)
             .at[:E, :H].set(w_ih.T).astype(compute_dtype))      # (Ep, Hp)
    bh_p = jnp.zeros((1, Hp), jnp.float32).at[0, :H].set(b_ih + b_hh)
    whh_p = jnp.zeros((Hp, Hp), jnp.float32).at[:H, :H].set(w_hh.T)  # f32
    wfc_p = (jnp.zeros((Hp, Vp), jnp.float32)
             .at[:H, :V].set(w_fc.T).astype(compute_dtype))      # (Hp, Vp)
    bfc_p = jnp.zeros((1, Vp), jnp.float32).at[0, :V].set(b_fc)

    # 1) Input projection hoisted out of the recurrence: one big tiled matmul
    #    (Bp*T, Ep) @ (Ep, Hp) + (b_ih + b_hh)  ->  (Bp*T, Hp)  in f32.
    x2d = x_p.reshape(Bp * T, Ep).astype(compute_dtype)
    xp2d = _matmul_bias(x2d, wih_p, bh_p)

    # 2) Serial recurrence: only h @ W_hh + tanh per step.  Time-major so each
    #    per-step slab is a dense (B_BLK, Hp) = (8, 128) tile.
    xp_tm = xp2d.reshape(Bp, T, Hp).transpose(1, 0, 2)           # (T, Bp, Hp)
    h_all = _recurrence(xp_tm, whh_p)                            # (T, Bp, Hp)

    # 3) Output FC hoisted out of the recurrence, done batch-first so the
    #    (B, T, V) logits never need a transpose (only the V/H-times smaller
    #    h_all is reordered).
    h_bf = (h_all.transpose(1, 0, 2)
            .reshape(Bp * T, Hp).astype(compute_dtype))          # (Bp*T, Hp)
    logits2d = _matmul_bias(h_bf, wfc_p, bfc_p)                  # (Bp*T, Vp)
    return logits2d.reshape(Bp, T, Vp)[:B, :, :V]                # (B, T, V)


# ---------------------------------------------------------------------------
# Pure-JAX reference (matches torch semantics) and parameter init
# ---------------------------------------------------------------------------
def rnn_forward_ref(x_idx, params):
    emb_w, w_ih, w_hh, b_ih, b_hh, w_fc, b_fc = (
        params["emb_w"], params["w_ih"], params["w_hh"],
        params["b_ih"], params["b_hh"], params["w_fc"], params["b_fc"])
    x_emb = jnp.take(emb_w, x_idx, axis=0)                       # (B, T, E)
    B, T, _ = x_emb.shape
    H = w_ih.shape[0]

    def step(h, x_t):
        h_new = jnp.tanh(x_t @ w_ih.T + b_ih + h @ w_hh.T + b_hh)
        return h_new, h_new

    h0 = jnp.zeros((B, H), jnp.float32)
    _, outs = lax.scan(step, h0, jnp.transpose(x_emb, (1, 0, 2)))
    out = jnp.transpose(outs, (1, 0, 2))                         # (B, T, H)
    return out @ w_fc.T + b_fc                                   # (B, T, V)


def init_params(key, cb_len, tz_size, hidden_size):
    ks = jax.random.split(key, 7)
    k_rnn = 1.0 / jnp.sqrt(hidden_size)
    k_fc = 1.0 / jnp.sqrt(hidden_size)
    return {
        # nn.Embedding: N(0, 1)
        "emb_w": jax.random.normal(ks[0], (cb_len, tz_size), jnp.float32),
        # nn.RNN: U(-1/sqrt(H), 1/sqrt(H))
        "w_ih": jax.random.uniform(ks[1], (hidden_size, tz_size), jnp.float32, -k_rnn, k_rnn),
        "w_hh": jax.random.uniform(ks[2], (hidden_size, hidden_size), jnp.float32, -k_rnn, k_rnn),
        "b_ih": jax.random.uniform(ks[3], (hidden_size,), jnp.float32, -k_rnn, k_rnn),
        "b_hh": jax.random.uniform(ks[4], (hidden_size,), jnp.float32, -k_rnn, k_rnn),
        # nn.Linear: U(-1/sqrt(in), 1/sqrt(in))
        "w_fc": jax.random.uniform(ks[5], (cb_len, hidden_size), jnp.float32, -k_fc, k_fc),
        "b_fc": jax.random.uniform(ks[6], (cb_len,), jnp.float32, -k_fc, k_fc),
    }


if __name__ == "__main__":
    cb_len, tz_size, hidden_size = 32, 16, 8
    B, T = 2, 8

    key = jax.random.PRNGKey(0)
    k_param, k_x = jax.random.split(key)
    params = init_params(k_param, cb_len, tz_size, hidden_size)
    x_idx = jax.random.randint(k_x, (B, T), 0, cb_len, dtype=jnp.int32)

    out = rnn_forward(x_idx, params)
    out = jax.block_until_ready(out)

    ref = rnn_forward_ref(x_idx, params)
    assert out.shape == (B, T, cb_len), out.shape
    tol = 1e-5 if COMPUTE_DTYPE == jnp.float32 else 3e-2
    assert jnp.allclose(out, ref, atol=tol, rtol=tol), \
        float(jnp.max(jnp.abs(out - ref)))

    print("KERNEL_OK")
</pallas_src>

<mosaic_0001>
module attributes {stable_mosaic.version = 11 : i64} {
  func.func @matmul_bias_kernel(%arg0: i32, %arg1: memref<64x128xf32, #tpu.memory_space<vmem>>, %arg2: memref<128x128xf32, #tpu.memory_space<vmem>>, %arg3: memref<1x128xf32, #tpu.memory_space<vmem>>, %arg4: memref<64x128xf32, #tpu.memory_space<vmem>>) attributes {dimension_semantics = [#tpu.dimension_semantics<parallel>], iteration_bounds = array<i64: 1>, scalar_prefetch = 0 : i64, scratch_operands = 0 : i64, tpu.core_type = #tpu.core_type<tc>, window_params = [{transform_indices = @transform_0, window_bounds = array<i64: 64, 128>}, {pipeline_mode = #tpu.pipeline_mode<synchronous>, transform_indices = @transform_1, window_bounds = array<i64: 128, 128>}, {pipeline_mode = #tpu.pipeline_mode<synchronous>, transform_indices = @transform_2, window_bounds = array<i64: 1, 128>}, {transform_indices = @transform_3, window_bounds = array<i64: 64, 128>}]} {
    %c0 = arith.constant 0 : index
    %c0_0 = arith.constant 0 : index
    %0 = vector.load %arg1[%c0, %c0_0] : memref<64x128xf32, #tpu.memory_space<vmem>>, vector<64x128xf32>
    %c0_1 = arith.constant 0 : index
    %c0_2 = arith.constant 0 : index
    %1 = vector.load %arg2[%c0_1, %c0_2] : memref<128x128xf32, #tpu.memory_space<vmem>>, vector<128x128xf32>
    %cst = arith.constant dense<0.000000e+00> : vector<64x128xf32>
    %2 = tpu.matmul %0, %1, %cst {dimension_numbers = #tpu.dot_dimension_numbers<[1], [0], [0], [1], [0, 0, 1, 1], [], []>} : vector<64x128xf32>, vector<128x128xf32>, vector<64x128xf32> -> vector<64x128xf32>
    %c0_3 = arith.constant 0 : index
    %c0_4 = arith.constant 0 : index
    %3 = vector.load %arg3[%c0_3, %c0_4] : memref<1x128xf32, #tpu.memory_space<vmem>>, vector<1x128xf32>
    %4 = vector.broadcast %3 : vector<1x128xf32> to vector<64x128xf32>
    %5 = arith.addf %2, %4 : vector<64x128xf32>
    %c0_5 = arith.constant 0 : index
    %c0_6 = arith.constant 0 : index
    %6 = vector.load %arg4[%c0_5, %c0_6] : memref<64x128xf32, #tpu.memory_space<vmem>>, vector<64x128xf32>
    tpu.vector_store %arg4[%c0_5, %c0_6], %5 {strides = array<i32>} : memref<64x128xf32, #tpu.memory_space<vmem>>, vector<64x128xf32>,
    return
  }
  func.func @transform_0(%arg0: i32) -> (i32, i32) {
    %c0_i32 = arith.constant 0 : i32
    %c0_i32_0 = arith.constant 0 : i32
    return %arg0, %c0_i32 : i32, i32
  }
  func.func @transform_1(%arg0: i32) -> (i32, i32) {
    %c0_i32 = arith.constant 0 : i32
    %c0_i32_0 = arith.constant 0 : i32
    %c0_i32_1 = arith.constant 0 : i32
    return %c0_i32, %c0_i32_0 : i32, i32
  }
  func.func @transform_2(%arg0: i32) -> (i32, i32) {
    %c0_i32 = arith.constant 0 : i32
    %c0_i32_0 = arith.constant 0 : i32
    %c0_i32_1 = arith.constant 0 : i32
    return %c0_i32, %c0_i32_0 : i32, i32
  }
  func.func @transform_3(%arg0: i32) -> (i32, i32) {
    %c0_i32 = arith.constant 0 : i32
    %c0_i32_0 = arith.constant 0 : i32
    return %arg0, %c0_i32 : i32, i32
  }
}

</mosaic_0001>

<llo_original>
// kernel: tpu_custom_call.1
$region0: #{tpu_custom_call.1}
  #allocation0 [shape = 'u32[]', space=smem, size = 0x4, offset = 0x4, fixed_abs, tag = 'smem constant byte address 0x4 - core index']
  #allocation1 [shape = 'u32[72,128]{1,0:T(1,128)}', space=vmem, size = 0x9000, scoped, tag = 'internal scratch']
  %s0 = inlined_call_operand.hbm [shape: f32[64,128], index: 0, kind: input, shape index: {}]
  %s1 = inlined_call_operand.hbm [shape: f32[128,128], index: 1, kind: input, shape index: {}]
  %s2 = inlined_call_operand.vmem [shape: f32[1,128], index: 2, kind: input, shape index: {}]
  %s3 = inlined_call_operand.hbm [shape: f32[64,128], index: 3, kind: output, shape index: {}]
  %s4 = sld [smem:[#allocation0]]
  $region30: #{tpu_custom_call.1} parent=0
    _
  %s6 = ssub.s32 1, %s4
  %s7 = scalar_select 0, %s6, %s4
  $region1: #{tpu_custom_call.1} parent=0
    #allocation2 [shape = 'u8[32768]{0}', space=vmem, size = 0x8000, scoped, tag = 'input window, operand 0, single buffered']
    #allocation3 [shape = 's32[1]{0}', space=sflag, size = 0x4, scoped, tag = 'scoped memory for tpu_custom_call.1']
    #allocation4 [shape = 's32[1]{0}', space=sflag, size = 0x4, scoped, tag = 'scoped memory for tpu_custom_call.1']
    #allocation5 [shape = 'u8[65536]{0}', space=vmem, size = 0x10000, scoped, tag = 'input window, operand 1, single buffered']
    #allocation6 [shape = 's32[1]{0}', space=sflag, size = 0x4, scoped, tag = 'scoped memory for tpu_custom_call.1']
    #allocation7 [shape = 'u8[32768]{0}', space=vmem, size = 0x8000, scoped, tag = 'output window, operand 0, single buffered']
    %8 = vsyncpa [#allocation3], 0
    %9 = vsyncpa [#allocation6], 0
    %10 = vsyncpa [#allocation4], 0
    // Predicated region
    $region2: #{tpu_custom_call.1} parent=1 // pred_check
      _
    $region3: #{tpu_custom_call.1} parent=1 // pred_check_branch
      %12 = sbr.rel (0) target = $region5
    $region4: #{tpu_custom_call.1} parent=1 // pred_region
      %14 = vsyncadd [#allocation3], 0
      %s15 = sshll.u32 %s0, 4
      %s16 = int_to_ptr.hbm [resolvable:$true] %s15
      %s17 = sshll.u32 [#allocation2], 4
      %s18 = int_to_ptr.vmem [resolvable:$true] %s17
      %23 = dma.hbm_to_vmem [thread:$0]  %s16, 1024, %s18, [#allocation3], 128, 128, 8
    $region5: #{tpu_custom_call.1} parent=1 // pred_fallthru
      _
    // Predicated region
    $region6: #{tpu_custom_call.1} parent=1 // pred_check
      _
    $region7: #{tpu_custom_call.1} parent=1 // pred_check_branch
      %25 = sbr.rel (0) target = $region9
    $region8: #{tpu_custom_call.1} parent=1 // pred_region
      %27 = vsyncadd [#allocation6], 0
      %s28 = sshll.u32 %s1, 4
      %s29 = int_to_ptr.hbm [resolvable:$true] %s28
      %s30 = sshll.u32 [#allocation5], 4
      %s31 = int_to_ptr.vmem [resolvable:$true] %s30
      %36 = dma.hbm_to_vmem [thread:$0]  %s29, 2048, %s31, [#allocation6], 128, 128, 8
    $region9: #{tpu_custom_call.1} parent=1 // pred_fallthru
      _
    // Predicated region
    $region10: #{tpu_custom_call.1} parent=1 // pred_check
      _
    $region11: #{tpu_custom_call.1} parent=1 // pred_check_branch
      %38 = sbr.rel (0) target = $region13
    $region12: #{tpu_custom_call.1} parent=1 // pred_region
      _
    $region13: #{tpu_custom_call.1} parent=1 // pred_fallthru
      _
    // Predicated region
    $region14: #{tpu_custom_call.1} parent=1 // pred_check
      _
    $region15: #{tpu_custom_call.1} parent=1 // pred_check_branch
      %40 = sbr.rel (0) target = $region17
    $region16: #{tpu_custom_call.1} parent=1 // pred_region
      %42 = dma.done [#allocation3], 1024
    $region17: #{tpu_custom_call.1} parent=1 // pred_fallthru
      _
    // Predicated region
    $region18: #{tpu_custom_call.1} parent=1 // pred_check
      _
    $region19: #{tpu_custom_call.1} parent=1 // pred_check_branch
      %44 = sbr.rel (0) target = $region21
    $region20: #{tpu_custom_call.1} parent=1 // pred_region
      %46 = dma.done [#allocation6], 2048
    $region21: #{tpu_custom_call.1} parent=1 // pred_fallthru
      _
    %v47 = vld [vmem:[#allocation2] sm:$0xff]
    %v48 = vld [vmem:[#allocation2 + $0x8] sm:$0xff]
    %v49 = vld [vmem:[#allocation2 + $0x10] sm:$0xff]
    %v50 = vld [vmem:[#allocation2 + $0x18] sm:$0xff]
    %v51 = vld [vmem:[#allocation2 + $0x20] sm:$0xff]
    %v52 = vld [vmem:[#allocation2 + $0x28] sm:$0xff]
    %v53 = vld [vmem:[#allocation2 + $0x30] sm:$0xff]
    %v54 = vld [vmem:[#allocation2 + $0x38] sm:$0xff]
    %v55 = vld [vmem:[#allocation5] sm:$0xff]
    %v56 = vld [vmem:[#allocation5 + $0x8] sm:$0xff]
    %v57 = vld [vmem:[#allocation5 + $0x10] sm:$0xff]
    %v58 = vld [vmem:[#allocation5 + $0x18] sm:$0xff]
    %v59 = vld [vmem:[#allocation5 + $0x20] sm:$0xff]
    %v60 = vld [vmem:[#allocation5 + $0x28] sm:$0xff]
    %v61 = vld [vmem:[#allocation5 + $0x30] sm:$0xff]
    %v62 = vld [vmem:[#allocation5 + $0x38] sm:$0xff]
    %v63 = vld [vmem:[#allocation5 + $0x40] sm:$0xff]
    %v64 = vld [vmem:[#allocation5 + $0x48] sm:$0xff]
    %v65 = vld [vmem:[#allocation5 + $0x50] sm:$0xff]
    %v66 = vld [vmem:[#allocation5 + $0x58] sm:$0xff]
    %v67 = vld [vmem:[#allocation5 + $0x60] sm:$0xff]
    %v68 = vld [vmem:[#allocation5 + $0x68] sm:$0xff]
    %v69 = vld [vmem:[#allocation5 + $0x70] sm:$0xff]
    %v70 = vld [vmem:[#allocation5 + $0x78] sm:$0xff]
    %v71 = vld [vmem:[%s2] sm:$0x1]
    %v73 = vperm.slane %v71, 0
    %75 = vmatpush.msra.mxu0 %v70
    %76 = vmatpush.msra.mxu0 %v69
    %77 = vmatpush.msra.mxu0 %v68
    %78 = vmatpush.msra.mxu0 %v67
    %79 = vmatpush.msra.mxu0 %v66
    %80 = vmatpush.msra.mxu0 %v65
    %81 = vmatpush.msra.mxu0 %v64
    %82 = vmatpush.msra.mxu0 %v63
    %83 = vmatpush.msra.mxu0 %v62
    %84 = vmatpush.msra.mxu0 %v61
    %85 = vmatpush.msra.mxu0 %v60
    %86 = vmatpush.msra.mxu0 %v59
    %87 = vmatpush.msra.mxu0 %v58
    %88 = vmatpush.msra.mxu0 %v57
    %89 = vmatpush.msra.mxu0 %v56
    %90 = vmatpush.msra.mxu0 %v55
    %91 = vmatmul.f32.gmra.mxu0 %v47
    %v92 = vpop.f32.mrf.mxu0
    %v93 = vadd.f32 %v73, %v92
    %94 = vmatmul.f32.gmra.mxu0 %v48
    %v95 = vpop.f32.mrf.mxu0
    %v96 = vadd.f32 %v73, %v95
    %97 = vmatmul.f32.gmra.mxu0 %v49
    %v98 = vpop.f32.mrf.mxu0
    %v99 = vadd.f32 %v73, %v98
    %100 = vmatmul.f32.gmra.mxu0 %v50
    %v101 = vpop.f32.mrf.mxu0
    %v102 = vadd.f32 %v73, %v101
    %103 = vmatmul.f32.gmra.mxu0 %v51
    %v104 = vpop.f32.mrf.mxu0
    %v105 = vadd.f32 %v73, %v104
    %106 = vmatmul.f32.gmra.mxu0 %v52
    %v107 = vpop.f32.mrf.mxu0
    %v108 = vadd.f32 %v73, %v107
    %109 = vmatmul.f32.gmra.mxu0 %v53
    %v110 = vpop.f32.mrf.mxu0
    %v111 = vadd.f32 %v73, %v110
    %112 = vmatmul.f32.gmra.mxu0 %v54
    %v113 = vpop.f32.mrf.mxu0
    %v114 = vadd.f32 %v73, %v113
    %115 = vdwg.mxu0
    %116 = vst [vmem:[#allocation7] sm:$0xff] %v93
    %117 = vst [vmem:[#allocation7 + $0x8] sm:$0xff] %v96
    %118 = vst [vmem:[#allocation7 + $0x10] sm:$0xff] %v99
    %119 = vst [vmem:[#allocation7 + $0x18] sm:$0xff] %v102
    %120 = vst [vmem:[#allocation7 + $0x20] sm:$0xff] %v105
    %121 = vst [vmem:[#allocation7 + $0x28] sm:$0xff] %v108
    %122 = vst [vmem:[#allocation7 + $0x30] sm:$0xff] %v111
    %123 = vst [vmem:[#allocation7 + $0x38] sm:$0xff] %v114
    // Predicated region
    $region22: #{tpu_custom_call.1} parent=1 // pred_check
      _
    $region23: #{tpu_custom_call.1} parent=1 // pred_check_branch
      %125 = sbr.rel (0) target = $region25
    $region24: #{tpu_custom_call.1} parent=1 // pred_region
      %127 = vsyncadd [#allocation4], 0
      %s128 = sshll.u32 [#allocation7], 4
      %s129 = int_to_ptr.vmem [resolvable:$true] %s128
      %s130 = sshll.u32 %s3, 4
      %s131 = int_to_ptr.hbm [resolvable:$true] %s130
      %136 = dma.vmem_to_hbm [thread:$0]  %s129, 1024, %s131, [#allocation4], 128, 128, 8
    $region25: #{tpu_custom_call.1} parent=1 // pred_fallthru
      _
    // Predicated region
    $region26: #{tpu_custom_call.1} parent=1 // pred_check
      _
    $region27: #{tpu_custom_call.1} parent=1 // pred_check_branch
      %138 = sbr.rel (0) target = $region29
    $region28: #{tpu_custom_call.1} parent=1 // pred_region
      %140 = dma.done [#allocation4], 1024
    $region29: #{tpu_custom_call.1} parent=1 // pred_fallthru
      _
    %141 = vsyncpa [#allocation3], 1
    %142 = vsyncpa [#allocation6], 1
    %143 = vsyncpa [#allocation4], 1

</llo_original>
